<compile_context>
chip_gen: v5e
topology: v5e:2x2
jax: 0.10.0
libtpu: 0.0.40
codegen_flags: <defaults>
</compile_context>

<pallas_src>
import functools

import jax
import jax.numpy as jnp
from jax.experimental import pallas as pl
from jax.experimental.pallas import tpu as pltpu


def _choose_tile(dim: int, multiple: int, max_tile: int) -> int:
    """Largest divisor of `dim` that is a multiple of `multiple` and <= max_tile.
    Falls back to the full `dim` (a full-extent block is always legal)."""
    if dim <= max_tile:
        return dim
    best = None
    t = multiple
    while t <= max_tile:
        if dim % t == 0:
            best = t
        t += multiple
    return best if best is not None else dim


def _gate_kernel(x_ref, w_ref, o_ref, m_ref, *, k_size: int, pad: int):
    """Grid (B, num_hw_tiles): accumulate per-channel max over HW tiles; on the last
    tile run the k-tap channel conv as shift-and-add (SMEM taps) + sigmoid."""
    t = pl.program_id(1)

    @pl.when(t == 0)
    def _init():
        m_ref[...] = jnp.full(m_ref.shape, -jnp.inf, m_ref.dtype)

    x = x_ref[0]                                                    # (C, HW_TILE)
    m_ref[...] = jnp.maximum(
        m_ref[...], jnp.max(x, axis=-1, keepdims=True).astype(jnp.float32))

    @pl.when(t == pl.num_programs(1) - 1)
    def _finish():
        m = m_ref[...]                                              # (C, 1) f32
        c = m.shape[0]
        c_idx = jax.lax.broadcasted_iota(jnp.int32, (c, 1), 0)
        y = jnp.zeros((c, 1), jnp.float32)
        for j in range(k_size):
            off = j - pad                     # output channel reads m[chan + off]
            shift = (-off) % c
            shifted = pltpu.roll(m, shift, axis=0) if shift else m
            src = c_idx + off
            valid = (src >= 0) & (src < c)    # zero padding at channel boundaries
            y = y + w_ref[j] * jnp.where(valid, shifted, 0.0)
        o_ref[0] = jax.nn.sigmoid(y)                                 # (C, 1) f32


def _apply_kernel(x_ref, g_ref, o_ref):
    """Broadcast-multiply (C_TILE, HW_TILE) slab by its (C_TILE, 1) gate, in the
    input dtype (only the tiny gate slice is cast)."""
    scale = g_ref[0].astype(o_ref.dtype)                             # (C_TILE, 1)
    o_ref[0] = x_ref[0] * scale


def eca_forward(x, conv_weight, *, k_size: int = 3):
    """x: (B, C, H, W).  conv_weight: (1, 1, k_size) (torch Conv1d layout)."""
    B, C, H, W = x.shape
    HW = H * W
    pad = (k_size - 1) // 2
    dtype_bytes = x.dtype.itemsize

    xr = x.reshape(B, C, HW)
    w = conv_weight.reshape(k_size).astype(jnp.float32)

    # ---------------- Kernel A: pooled max -> channel conv -> sigmoid gate --------
    a_budget_elems = max(1, (4 * 1024 * 1024) // dtype_bytes)       # ~4 MiB / block
    hw_tile_a = _choose_tile(HW, 128, max(128, a_budget_elems // max(C, 1)))
    grid_a = (B, HW // hw_tile_a)

    gate = pl.pallas_call(
        functools.partial(_gate_kernel, k_size=k_size, pad=pad),
        out_shape=jax.ShapeDtypeStruct((B, C, 1), jnp.float32),
        grid=grid_a,
        in_specs=[
            pl.BlockSpec((1, C, hw_tile_a), lambda b, t: (b, 0, t)),
            pl.BlockSpec(memory_space=pltpu.MemorySpace.SMEM),       # (k,) conv taps
        ],
        out_specs=pl.BlockSpec((1, C, 1), lambda b, t: (b, 0, 0)),
        scratch_shapes=[pltpu.VMEM((C, 1), jnp.float32)],
        compiler_params=pltpu.CompilerParams(
            dimension_semantics=("parallel", "arbitrary"),
            vmem_limit_bytes=32 * 1024 * 1024,
        ),
        cost_estimate=pl.CostEstimate(
            flops=B * C * HW + 2 * B * C * k_size,
            transcendentals=B * C,
            bytes_accessed=B * C * HW * dtype_bytes + B * C * 4,
        ),
    )(xr, w)

    # ---------------- Kernel B: streamed broadcast multiply ------------------------
    b_budget_elems = max(1, (2 * 1024 * 1024) // dtype_bytes)       # ~2 MiB / block
    hw_tile = _choose_tile(HW, 128, max(128, b_budget_elems // 8))
    c_tile = _choose_tile(C, 8, max(8, b_budget_elems // hw_tile))
    grid_b = (B, C // c_tile, HW // hw_tile)

    out = pl.pallas_call(
        _apply_kernel,
        out_shape=jax.ShapeDtypeStruct((B, C, HW), x.dtype),
        grid=grid_b,
        in_specs=[
            pl.BlockSpec((1, c_tile, hw_tile), lambda b, ci, hi: (b, ci, hi)),
            pl.BlockSpec((1, c_tile, 1), lambda b, ci, hi: (b, ci, 0)),
        ],
        out_specs=pl.BlockSpec((1, c_tile, hw_tile), lambda b, ci, hi: (b, ci, hi)),
        compiler_params=pltpu.CompilerParams(
            dimension_semantics=("parallel", "parallel", "parallel"),
            vmem_limit_bytes=32 * 1024 * 1024,
        ),
        cost_estimate=pl.CostEstimate(
            flops=2 * B * C * HW,
            transcendentals=0,
            bytes_accessed=2 * B * C * HW * dtype_bytes + B * C * 4,
        ),
    )(xr, gate)
    return out.reshape(B, C, H, W)


def eca_reference(x, conv_weight, *, k_size: int = 3):
    """Plain-JAX reference mirroring the PyTorch forward."""
    pad = (k_size - 1) // 2
    B, C, H, W = x.shape
    m = jnp.max(x, axis=(2, 3))                                      # (B, C)
    w = conv_weight.reshape(k_size)
    mp = jnp.pad(m, ((0, 0), (pad, pad)))                            # zero-pad channels
    y = jnp.zeros_like(m)
    for j in range(k_size):
        y = y + w[j] * mp[:, j:j + C]
    gate = jax.nn.sigmoid(y)[:, :, None, None]                       # (B, C, 1, 1)
    return x * gate


if __name__ == "__main__":
    key = jax.random.PRNGKey(0)
    kx, kw = jax.random.split(key)

    B, C, H, W = 2, 4, 16, 16
    k_size = 3

    x = jax.random.normal(kx, (B, C, H, W), dtype=jnp.float32)
    # Deterministic conv1d weight init (kaiming-uniform-like bound = 1/sqrt(k)).
    bound = 1.0 / jnp.sqrt(jnp.float32(k_size))
    conv_weight = jax.random.uniform(
        kw, (1, 1, k_size), minval=-bound, maxval=bound, dtype=jnp.float32
    )

    out = eca_forward(x, conv_weight, k_size=k_size)
    jax.block_until_ready(out)

    ref = eca_reference(x, conv_weight, k_size=k_size)
    assert out.shape == x.shape
    assert jnp.allclose(out, ref, atol=1e-5, rtol=1e-5), "mismatch vs reference"

    print("KERNEL_OK")
</pallas_src>

<mosaic_0001>
module attributes {stable_mosaic.version = 11 : i64} {
  func.func @_gate_kernel(%arg0: i32, %arg1: i32, %arg2: memref<1x4x256xf32, #tpu.memory_space<vmem>>, %arg3: memref<3xf32, #tpu.memory_space<smem>>, %arg4: memref<1x4x1xf32, #tpu.memory_space<vmem>>, %arg5: memref<4x1xf32, #tpu.memory_space<vmem>>) attributes {dimension_semantics = [#tpu.dimension_semantics<parallel>, #tpu.dimension_semantics<arbitrary>], iteration_bounds = array<i64: 2, 1>, scalar_prefetch = 0 : i64, scratch_operands = 1 : i64, tpu.core_type = #tpu.core_type<tc>, window_params = [{transform_indices = @transform_0, window_bounds = array<i64: 1, 4, 256>}, {transform_indices = @transform_1, window_bounds = array<i64: 3>}, {transform_indices = @transform_2, window_bounds = array<i64: 1, 4, 1>}]} {
    %c0_i32 = arith.constant 0 : i32
    %0 = arith.cmpi eq, %arg1, %c0_i32 : i32
    %1 = arith.extui %0 : i1 to i32
    %c0_i32_0 = arith.constant 0 : i32
    %2 = arith.cmpi ne, %1, %c0_i32_0 : i32
    scf.if %2 {
      %cst_9 = arith.constant 0xFF800000 : f32
      %13 = vector.broadcast %cst_9 : f32 to vector<4x1xf32>
      %c0_10 = arith.constant 0 : index
      %c0_11 = arith.constant 0 : index
      %14 = vector.load %arg5[%c0_10, %c0_11] : memref<4x1xf32, #tpu.memory_space<vmem>>, vector<4x1xf32>
      tpu.vector_store %arg5[%c0_10, %c0_11], %13 {strides = array<i32>} : memref<4x1xf32, #tpu.memory_space<vmem>>, vector<4x1xf32>,
    } else {
    }
    %c0 = arith.constant 0 : index
    %c0_1 = arith.constant 0 : index
    %c0_2 = arith.constant 0 : index
    %3 = vector.load %arg2[%c0, %c0_1, %c0_2] : memref<1x4x256xf32, #tpu.memory_space<vmem>>, vector<1x4x256xf32>
    %4 = vector.shape_cast %3 : vector<1x4x256xf32> to vector<4x256xf32>
    %c0_3 = arith.constant 0 : index
    %c0_4 = arith.constant 0 : index
    %5 = vector.load %arg5[%c0_3, %c0_4] : memref<4x1xf32, #tpu.memory_space<vmem>>, vector<4x1xf32>
    %cst = arith.constant dense<0xFF800000> : vector<4xf32>
    %6 = vector.multi_reduction <maximumf>, %4, %cst [1] : vector<4x256xf32> to vector<4xf32>
    %7 = vector.shape_cast %6 : vector<4xf32> to vector<4x1xf32>
    %8 = arith.maximumf %5, %7 : vector<4x1xf32>
    %c0_5 = arith.constant 0 : index
    %c0_6 = arith.constant 0 : index
    %9 = vector.load %arg5[%c0_5, %c0_6] : memref<4x1xf32, #tpu.memory_space<vmem>>, vector<4x1xf32>
    tpu.vector_store %arg5[%c0_5, %c0_6], %8 {strides = array<i32>} : memref<4x1xf32, #tpu.memory_space<vmem>>, vector<4x1xf32>,
    %c0_i32_7 = arith.constant 0 : i32
    %10 = arith.cmpi eq, %arg1, %c0_i32_7 : i32
    %11 = arith.extui %10 : i1 to i32
    %c0_i32_8 = arith.constant 0 : i32
    %12 = arith.cmpi ne, %11, %c0_i32_8 : i32
    scf.if %12 {
      %c0_9 = arith.constant 0 : index
      %c0_10 = arith.constant 0 : index
      %13 = vector.load %arg5[%c0_9, %c0_10] : memref<4x1xf32, #tpu.memory_space<vmem>>, vector<4x1xf32>
      %14 = tpu.iota {dimensions = array<i32: 0>} : vector<4x1xi32>
      %cst_11 = arith.constant 0.000000e+00 : f32
      %15 = vector.broadcast %cst_11 : f32 to vector<4x1xf32>
      %c1_i32 = arith.constant 1 : i32
      %16 = tpu.dynamic_rotate %13 by %c1_i32 dim 0 : vector<4x1xf32>, i32 -> vector<4x1xf32>
      %c-1_i32 = arith.constant -1 : i32
      %17 = vector.broadcast %c-1_i32 : i32 to vector<4x1xi32>
      %18 = arith.addi %14, %17 : vector<4x1xi32>
      %c0_i32_12 = arith.constant 0 : i32
      %19 = vector.broadcast %c0_i32_12 : i32 to vector<4x1xi32>
      %20 = arith.cmpi sge, %18, %19 : vector<4x1xi32>
      %c4_i32 = arith.constant 4 : i32
      %21 = vector.broadcast %c4_i32 : i32 to vector<4x1xi32>
      %22 = arith.cmpi slt, %18, %21 : vector<4x1xi32>
      %23 = arith.andi %20, %22 : vector<4x1xi1>
      %c0_13 = arith.constant 0 : index
      %24 = memref.load %arg3[%c0_13] : memref<3xf32, #tpu.memory_space<smem>>
      %cst_14 = arith.constant 0.000000e+00 : f32
      %25 = vector.broadcast %cst_14 : f32 to vector<4x1xf32>
      %26 = arith.select %23, %16, %25 : vector<4x1xi1>, vector<4x1xf32>
      %27 = vector.broadcast %24 : f32 to vector<4x1xf32>
      %28 = arith.mulf %27, %26 : vector<4x1xf32>
      %29 = arith.addf %15, %28 : vector<4x1xf32>
      %c0_i32_15 = arith.constant 0 : i32
      %30 = vector.broadcast %c0_i32_15 : i32 to vector<4x1xi32>
      %31 = arith.addi %14, %30 : vector<4x1xi32>
      %c0_i32_16 = arith.constant 0 : i32
      %32 = vector.broadcast %c0_i32_16 : i32 to vector<4x1xi32>
      %33 = arith.cmpi sge, %31, %32 : vector<4x1xi32>
      %c4_i32_17 = arith.constant 4 : i32
      %34 = vector.broadcast %c4_i32_17 : i32 to vector<4x1xi32>
      %35 = arith.cmpi slt, %31, %34 : vector<4x1xi32>
      %36 = arith.andi %33, %35 : vector<4x1xi1>
      %c1 = arith.constant 1 : index
      %37 = memref.load %arg3[%c1] : memref<3xf32, #tpu.memory_space<smem>>
      %cst_18 = arith.constant 0.000000e+00 : f32
      %38 = vector.broadcast %cst_18 : f32 to vector<4x1xf32>
      %39 = arith.select %36, %13, %38 : vector<4x1xi1>, vector<4x1xf32>
      %40 = vector.broadcast %37 : f32 to vector<4x1xf32>
      %41 = arith.mulf %40, %39 : vector<4x1xf32>
      %42 = arith.addf %29, %41 : vector<4x1xf32>
      %c3_i32 = arith.constant 3 : i32
      %43 = tpu.dynamic_rotate %13 by %c3_i32 dim 0 : vector<4x1xf32>, i32 -> vector<4x1xf32>
      %c1_i32_19 = arith.constant 1 : i32
      %44 = vector.broadcast %c1_i32_19 : i32 to vector<4x1xi32>
      %45 = arith.addi %14, %44 : vector<4x1xi32>
      %c0_i32_20 = arith.constant 0 : i32
      %46 = vector.broadcast %c0_i32_20 : i32 to vector<4x1xi32>
      %47 = arith.cmpi sge, %45, %46 : vector<4x1xi32>
      %c4_i32_21 = arith.constant 4 : i32
      %48 = vector.broadcast %c4_i32_21 : i32 to vector<4x1xi32>
      %49 = arith.cmpi slt, %45, %48 : vector<4x1xi32>
      %50 = arith.andi %47, %49 : vector<4x1xi1>
      %c2 = arith.constant 2 : index
      %51 = memref.load %arg3[%c2] : memref<3xf32, #tpu.memory_space<smem>>
      %cst_22 = arith.constant 0.000000e+00 : f32
      %52 = vector.broadcast %cst_22 : f32 to vector<4x1xf32>
      %53 = arith.select %50, %43, %52 : vector<4x1xi1>, vector<4x1xf32>
      %54 = vector.broadcast %51 : f32 to vector<4x1xf32>
      %55 = arith.mulf %54, %53 : vector<4x1xf32>
      %56 = arith.addf %42, %55 : vector<4x1xf32>
      %57 = arith.negf %56 : vector<4x1xf32>
      %58 = math.exp %57 : vector<4x1xf32>
      %cst_23 = arith.constant 1.000000e+00 : f32
      %59 = vector.broadcast %cst_23 : f32 to vector<4x1xf32>
      %60 = arith.addf %59, %58 : vector<4x1xf32>
      %61 = arith.divf %59, %60 : vector<4x1xf32>
      %c0_24 = arith.constant 0 : index
      %c0_25 = arith.constant 0 : index
      %c0_26 = arith.constant 0 : index
      %62 = vector.load %arg4[%c0_24, %c0_25, %c0_26] : memref<1x4x1xf32, #tpu.memory_space<vmem>>, vector<1x4x1xf32>
      %63 = vector.shape_cast %62 : vector<1x4x1xf32> to vector<4x1xf32>
      %64 = vector.shape_cast %61 : vector<4x1xf32> to vector<1x4x1xf32>
      tpu.vector_store %arg4[%c0_24, %c0_25, %c0_26], %64 {strides = array<i32>} : memref<1x4x1xf32, #tpu.memory_space<vmem>>, vector<1x4x1xf32>,
    } else {
    }
    return
  }
  func.func @transform_0(%arg0: i32, %arg1: i32) -> (i32, i32, i32) {
    %c0_i32 = arith.constant 0 : i32
    %c0_i32_0 = arith.constant 0 : i32
    return %arg0, %c0_i32, %arg1 : i32, i32, i32
  }
  func.func @transform_1(%arg0: i32, %arg1: i32) -> i32 {
    %c0_i32 = arith.constant 0 : i32
    %c0_i32_0 = arith.constant 0 : i32
    return %c0_i32 : i32
  }
  func.func @transform_2(%arg0: i32, %arg1: i32) -> (i32, i32, i32) {
    %c0_i32 = arith.constant 0 : i32
    %c0_i32_0 = arith.constant 0 : i32
    %c0_i32_1 = arith.constant 0 : i32
    return %arg0, %c0_i32, %c0_i32_0 : i32, i32, i32
  }
}

</mosaic_0001>

<llo_original>
// kernel: tpu_custom_call.1
$region0: #{tpu_custom_call.1}
  #allocation0 [shape = 'u32[]', space=smem, size = 0x4, offset = 0x4, fixed_abs, tag = 'smem constant byte address 0x4 - core index']
  #allocation1 [shape = 'u32[72,128]{1,0:T(1,128)}', space=vmem, size = 0x9000, scoped, tag = 'internal scratch']
  #allocation2 [shape = 'f32[4,1]{1,0:T(4,128)}', space=vmem, size = 0x800, scoped, tag = 'scratch operand']
  %s0 = inlined_call_operand.hbm [shape: f32[2,4,256], index: 0, kind: input, shape index: {}]
  %s1 = inlined_call_operand.hbm [shape: f32[3], index: 1, kind: input, shape index: {}]
  %s2 = inlined_call_operand.vmem [shape: f32[2,4,1], index: 2, kind: output, shape index: {}]
  %s3 = sld [smem:[#allocation0]]
  $region57: #{tpu_custom_call.1} parent=0
    _
  %s5 = ssub.s32 1, %s3
  %s6 = scalar_select 0, %s5, %s3
  $region1: #{tpu_custom_call.1} parent=0
    #allocation3 [shape = 'u8[8192]{0}', space=vmem, size = 0x2000, scoped, tag = 'input window, operand 0']
    #allocation4 [shape = 's32[2]{0}', space=sflag, size = 0x8, scoped, tag = 'scoped memory for tpu_custom_call.1']
    #allocation5 [shape = 's32[2]{0}', space=sflag, size = 0x8, scoped, tag = 'scoped memory for tpu_custom_call.1']
    #allocation6 [shape = 'u8[512]{0}', space=smem, size = 0x200, scoped, tag = 'input window, operand 1, single buffered']
    %7 = vsyncpa [#allocation4], 0
    %s8 = scalar_lea.sflag [#allocation4], 1
    %9 = vsyncpa %s8, 0
    %10 = vsyncpa [#allocation5], 0
    loop: start=0, step=1, limit=4
    $region2: #{tpu_custom_call.1} parent=1 // loop_pre_header
      _
    $region3: #{tpu_custom_call.1} parent=1 // loop_header
      %s12 = sphi 0, %s16
      %p13 = scmp.ge.s32.totalorder %s12, 4
      %s19 = sphi 0, %s31
      %s20 = sphi 0, %s27
      %s21 = sphi 0, %s19
      %s22 = sphi 0, %s20
      %s23 = sphi 0, %s21
      %s24 = sphi 0, %s22
      %s36 = sphi 0, %s38
      %s39 = sphi 0, %s36
      %s40 = sphi 0, %s39
      %s56 = sphi 0, %s40
      %s60 = sphi 0, %s60
      %s62 = sphi 0, %s60
      %s63 = sphi 0, %s62
      %s77 = sphi 0, %s63
      %s83 = sphi 0, %s85
      %s86 = sphi 0, %s83
      %s87 = sphi 0, %s86
      %s103 = sphi 0, %s87
    $region4: #{tpu_custom_call.1} parent=1 // loop_header_branch
      %15 = sbr.rel (%p13) target = $region8
    $region5: #{tpu_custom_call.1} parent=1 // loop_body
      %s17 = ssub.s32 %s12, 1
      %s18 = ssub.s32 %s12, 2
      %s25 = sadd.s32 1, %s20
      %p26 = scmp.ge.s32.totalorder %s25, 1
      %s27 = scalar_select %p26, 0, %s25
      %s28 = sadd.s32 1, %s19
      %s29 = scalar_select %p26, %s28, %s19
      %p30 = scmp.ge.s32.totalorder %s29, 2
      %s31 = scalar_select %p30, 0, %s29
      %s32 = ssub.s32 %s19, %s31
      %s33 = ssub.s32 %s20, %s27
      %s34 = sor.u32 %s32, %s33
      %p35 = scmp.eq.s32.totalorder %s34, 0
      %s37 = sadd.s32 %s36, 1
      %s38 = scalar_select %p35, %s36, %s37
      %p41 = pneg %p35
      %p42 = scmp.eq.s32.totalorder %s12, 1
      %p43 = por %p41, %p42
      %p44 = scmp.ne.s32.totalorder %s36, %s39
      %p45 = scmp.eq.s32.totalorder %s12, 0
      %p46 = por %p44, %p45
      %p47 = scmp.ne.s32.totalorder %s36, %s39
      %p48 = scmp.eq.s32.totalorder %s17, 1
      %p49 = por %p47, %p48
      %p50 = scmp.ne.s32.totalorder %s39, %s40
      %p51 = scmp.eq.s32.totalorder %s17, 0
      %p52 = por %p50, %p51
      %p53 = scmp.ne.s32.totalorder %s39, %s40
      %p54 = scmp.eq.s32.totalorder %s18, 1
      %p55 = por %p53, %p54
      %p57 = scmp.ne.s32.totalorder %s40, %s56
      %p58 = scmp.eq.s32.totalorder %s18, 0
      %p59 = por %p57, %p58
      %s61 = sadd.s32 %s60, 1
      %p64 = scmp.eq.s32.totalorder %s12, 1
      %p65 = scmp.ne.s32.totalorder %s60, %s62
      %p66 = scmp.eq.s32.totalorder %s12, 0
      %p67 = por %p65, %p66
      %p68 = scmp.ne.s32.totalorder %s60, %s62
      %p69 = scmp.eq.s32.totalorder %s17, 1
      %p70 = por %p68, %p69
      %p71 = scmp.ne.s32.totalorder %s62, %s63
      %p72 = scmp.eq.s32.totalorder %s17, 0
      %p73 = por %p71, %p72
      %p74 = scmp.ne.s32.totalorder %s62, %s63
      %p75 = scmp.eq.s32.totalorder %s18, 1
      %p76 = por %p74, %p75
      %p78 = scmp.ne.s32.totalorder %s63, %s77
      %p79 = scmp.eq.s32.totalorder %s18, 0
      %p80 = por %p78, %p79
      %s81 = ssub.s32 %s19, %s31
      %p82 = scmp.eq.s32.totalorder %s81, 0
      %s84 = sadd.s32 %s83, 1
      %s85 = scalar_select %p82, %s83, %s84
      %p88 = pneg %p82
      %p89 = scmp.eq.s32.totalorder %s12, 1
      %p90 = por %p88, %p89
      %p91 = scmp.ne.s32.totalorder %s83, %s86
      %p92 = scmp.eq.s32.totalorder %s12, 0
      %p93 = por %p91, %p92
      %p94 = scmp.ne.s32.totalorder %s83, %s86
      %p95 = scmp.eq.s32.totalorder %s17, 1
      %p96 = por %p94, %p95
      %p97 = scmp.ne.s32.totalorder %s86, %s87
      %p98 = scmp.eq.s32.totalorder %s17, 0
      %p99 = por %p97, %p98
      %p100 = scmp.ne.s32.totalorder %s86, %s87
      %p101 = scmp.eq.s32.totalorder %s18, 1
      %p102 = por %p100, %p101
      %p104 = scmp.ne.s32.totalorder %s87, %s103
      %p105 = scmp.eq.s32.totalorder %s18, 0
      %p106 = por %p104, %p105
      %p107 = scmp.le.s32.totalorder 1, %s12
      %p108 = scmp.lt.s32.totalorder %s12, 3
      %p109 = pnand %p107, %p108
      %p110 = pneg %p109
      // Predicated region
      $region9: #{tpu_custom_call.1} parent=5 // pred_check
        _
      $region10: #{tpu_custom_call.1} parent=5 // pred_check_branch
        %112 = sbr.rel (%p109) target = $region12
      $region11: #{tpu_custom_call.1} parent=5 // pred_region
        %s113 = ssub.s32 %s12, 1
        // Predicated region
        $region13: #{tpu_custom_call.1} parent=11 // pred_check
          %p114 = pneg %p73
        $region14: #{tpu_custom_call.1} parent=11 // pred_check_branch
          %116 = sbr.rel (%p114) target = $region16
        $region15: #{tpu_custom_call.1} parent=11 // pred_region
          %118 = vsyncadd [#allocation5], 0
          %s120 = sshll.u32 %s1, 4
          %s121 = int_to_ptr.hbm [resolvable:$true] %s120
          %123 = dma.hbm_to_smem %s121, 16, [#allocation6], [#allocation5]
        $region16: #{tpu_custom_call.1} parent=11 // pred_fallthru
          _
      $region12: #{tpu_custom_call.1} parent=5 // pred_fallthru
        _
      %p124 = scmp.lt.s32.totalorder %s12, 2
      // Predicated region
      $region17: #{tpu_custom_call.1} parent=5 // pred_check
        %p125 = pneg %p124
      $region18: #{tpu_custom_call.1} parent=5 // pred_check_branch
        %127 = sbr.rel (%p125) target = $region20
      $region19: #{tpu_custom_call.1} parent=5 // pred_region
        // Predicated region
        $region21: #{tpu_custom_call.1} parent=19 // pred_check
          %p128 = pneg %p46
        $region22: #{tpu_custom_call.1} parent=19 // pred_check_branch
          %130 = sbr.rel (%p128) target = $region24
        $region23: #{tpu_custom_call.1} parent=19 // pred_region
          %s131 = sand.u32 %s36, 1
          %s132 = scalar_lea.sflag [#allocation4], %s131
          %s133 = sand.u32 %s36, 1
          %s134 = smul.addr %s133, 8
          %s135 = scalar_lea.vmem [#allocation3], %s134
          %s136 = smul.u32 2, %s20
          %138 = vsyncadd %s132, 0
          %s139 = smul.addr %s19, 2
          %s140 = sadd.s32 %s136, %s139
          %s141 = smul.addr %s140, 4
          %s142 = scalar_lea.hbm %s0, %s141
          %s144 = sshll.u32 %s142, 4
          %s145 = int_to_ptr.hbm [resolvable:$true] %s144
          %s146 = sshll.u32 %s135, 4
          %s147 = int_to_ptr.vmem [resolvable:$true] %s146
          %149 = dma.hbm_to_vmem [thread:$0]  %s145, 128, %s147, %s132
        $region24: #{tpu_custom_call.1} parent=19 // pred_fallthru
          _
      $region20: #{tpu_custom_call.1} parent=5 // pred_fallthru
        _
      %p150 = scmp.le.s32.totalorder 1, %s12
      %p151 = scmp.lt.s32.totalorder %s12, 3
      %p152 = pnand %p150, %p151
      %p153 = pneg %p152
      // Predicated region
      $region25: #{tpu_custom_call.1} parent=5 // pred_check
        _
      $region26: #{tpu_custom_call.1} parent=5 // pred_check_branch
        %155 = sbr.rel (%p152) target = $region28
      $region27: #{tpu_custom_call.1} parent=5 // pred_region
        %s156 = ssub.s32 %s12, 1
        %s157 = sand.u32 %s39, 1
        %s158 = scalar_lea.sflag [#allocation4], %s157
        %s159 = sand.u32 %s39, 1
        %s160 = smul.addr %s159, 8
        %s161 = scalar_lea.vmem [#allocation3], %s160
        // Predicated region
        $region29: #{tpu_custom_call.1} parent=27 // pred_check
          %p162 = pneg %p52
        $region30: #{tpu_custom_call.1} parent=27 // pred_check_branch
          %164 = sbr.rel (%p162) target = $region32
        $region31: #{tpu_custom_call.1} parent=27 // pred_region
          %166 = dma.done %s158, 128
        $region32: #{tpu_custom_call.1} parent=27 // pred_fallthru
          _
        // Predicated region
        $region33: #{tpu_custom_call.1} parent=27 // pred_check
          %p167 = pneg %p73
        $region34: #{tpu_custom_call.1} parent=27 // pred_check_branch
          %169 = sbr.rel (%p167) target = $region36
        $region35: #{tpu_custom_call.1} parent=27 // pred_region
          %171 = dma.done [#allocation5], 16
        $region36: #{tpu_custom_call.1} parent=27 // pred_fallthru
          _
        %172 = sfence
        %s173 = sand.u32 %s39, 1
        %s174 = scalar_lea.sflag [#allocation4], %s173
        %s175 = sand.u32 %s39, 1
        %s176 = smul.addr %s175, 8
        %s177 = scalar_lea.vmem [#allocation3], %s176
        %p178 = pneg %p52
        %p179 = pneg %p49
        %p180 = pneg %p73
        %p181 = pneg %p70
        %p182 = pneg %p99
        %p183 = pneg %p96
        %p184 = scmp.lt.s32.totalorder %s21, 1
        %s185 = scalar_select %p184, %s21, 1
        %s186 = smul.addr %s185, 4
        %s187 = scalar_lea.vmem %s2, %s186
        %s188 = smul.u32 2, %s22
        %p189 = scmp.lt.s32.totalorder %s21, 1
        %s190 = scalar_select %p189, %s21, 1
        %s191 = smul.addr %s190, 4
        %s192 = scalar_lea.vmem %s2, %s191
        %p193 = scmp.eq.s32.totalorder %s22, 0
        // Predicated region
        $region37: #{tpu_custom_call.1} parent=27 // pred_check
          %p194 = pneg %p193
        $region38: #{tpu_custom_call.1} parent=27 // pred_check_branch
          %196 = sbr.rel (%p194) target = $region40
        $region39: #{tpu_custom_call.1} parent=27 // pred_region
          %vm197 = vcmask 3072
          %198 = vst.msk [vmem:[#allocation2] sm:$0xf] %vm197, -inf
        $region40: #{tpu_custom_call.1} parent=27 // pred_fallthru
          _
        %v199 = vld [vmem:[%s161] sm:$0xff]
        %v200 = vld [vmem:[#allocation2] sm:$0xf]
        %202 = vst [vmem:[#allocation1] ss:$2 sm:$0xff] %v199
        %v203 = vld.sshfl [vmem:[#allocation1] sm:$0xff pattern:$0x75316420]
        %v204 = vld.sshfl [vmem:[#allocation1 + $0x8] sm:$0xff pattern:$0x75316420]
        %vm207 = vcmask 1043456
        %v208 = vsel %vm207, %v203, -inf
        %v209 = vsel %vm207, %v204, -inf
        %v210 = vmax.f32 %v208, %v209
        %211 = vmax.xlane.f32.xlu0 %v210
        %v212 = vpop.xlane.xlu0 %211
        %v213 = vmax.f32 %v200, %v212
        %vm214 = vcmask 3072
        %215 = vst.msk [vmem:[#allocation2] sm:$0xf] %vm214, %v213
        // Predicated region
        $region41: #{tpu_custom_call.1} parent=27 // pred_check
          %p216 = pneg %p193
        $region42: #{tpu_custom_call.1} parent=27 // pred_check_branch
          %218 = sbr.rel (%p216) target = $region44
        $region43: #{tpu_custom_call.1} parent=27 // pred_region
          %v219 = vld [vmem:[#allocation2] sm:$0xf]
          %v220 = vlaneseq
          %v221 = vshrl.u32 %v220, 7
          %vm222 = vcmask 1047556
          %v223 = vrot.slane %v219, 4
          %v224 = vsel %vm222, %v223, %v219
          %v225 = vrot.slane %v224, 4
          %v226 = vsel %vm222, %v225, %v219
          %v227 = vadd.s32 %v221, 4294967295
          %vm228 = vcmp.ge.s32.totalorder %v227, 0
          %vm229 = vcmp.lt.s32.totalorder %v227, 4
          %vm230 = vmand %vm228, %vm229
          %s231 = sld [smem:[#allocation6]]
          %v233 = vrot.slane %v226, 3
          %v235 = vsel %vm230, %v233, 0.0
          %v236 = vstv %s231
          %v237 = vmul.f32 %v236, %v235
          %v238 = vadd.f32 %v237, 0.0
          %vm239 = vcmp.ge.s32.totalorder %v221, 0
          %vm240 = vcmp.lt.s32.totalorder %v221, 4
          %vm241 = vmand %vm239, %vm240
          %s242 = sld [smem:[#allocation6 + $0x1]]
          %v243 = vsel %vm241, %v219, 0.0
          %v244 = vstv %s242
          %v245 = vmul.f32 %v244, %v243
          %v246 = vadd.f32 %v238, %v245
          %v247 = vadd.s32 %v221, 1
          %vm248 = vcmp.ge.s32.totalorder %v247, 0
          %vm249 = vcmp.lt.s32.totalorder %v247, 4
          %vm250 = vmand %vm248, %vm249
          %s251 = sld [smem:[#allocation6 + $0x2]]
          %v252 = vrot.slane %v226, 1
          %v254 = vsel %vm250, %v252, 0.0
          %v255 = vstv %s251
          %v256 = vmul.f32 %v255, %v254
          %v257 = vadd.f32 %v246, %v256
          %v258 = vxor.u32 %v257, 2147483648
          %v259 = vmul.f32 %v258, 1.442695
          %v260 = vpow.pop %v259
          %v261 = vadd.f32 %v260, 1.0
          %v262 = vrcp.pop %v261
          %v263 = vmul.f32 %v261, %v262
          %v264 = vsub.f32 1.0, %v263
          %v265 = vmul.f32 %v262, %v264
          %v266 = vadd.f32 %v262, %v265
          %vm267 = vweird.f32 %v261
          %vm268 = vweird.f32 %v262
          %vm269 = vmor %vm267, %vm268
          %v270 = vsel %vm269, %v262, %v266
          %v271 = vand.u32 2147483647, %v261
          %vm272 = vcmp.eq.f32.partialorder %v271, 8.507059e+37
          %v273 = vand.u32 %v261, 2147483648
          %v274 = vor.u32 1.1754944e-38, %v273
          %v275 = vsel %vm272, %v274, %v270
          %v276 = vmul.f32 1.0, %v275
          %277 = vst.msk [vmem:[%s192] sm:$0xf] %vm214, %v276
        $region44: #{tpu_custom_call.1} parent=27 // pred_fallthru
          _
        %p278 = scmp.lt.s32.totalorder %s21, 1
        %s279 = scalar_select %p278, %s21, 1
        %s280 = smul.addr %s279, 4
        %s281 = scalar_lea.vmem %s2, %s280
        // Predicated region
        $region45: #{tpu_custom_call.1} parent=27 // pred_check
          %p282 = pneg %p96
        $region46: #{tpu_custom_call.1} parent=27 // pred_check_branch
          %284 = sbr.rel (%p282) target = $region48
        $region47: #{tpu_custom_call.1} parent=27 // pred_region
          _
        $region48: #{tpu_custom_call.1} parent=27 // pred_fallthru
          _
      $region28: #{tpu_custom_call.1} parent=5 // pred_fallthru
        _
      %p285 = scmp.le.s32.totalorder 2, %s12
      // Predicated region
      $region49: #{tpu_custom_call.1} parent=5 // pred_check
        %p286 = pneg %p285
      $region50: #{tpu_custom_call.1} parent=5 // pred_check_branch
        %288 = sbr.rel (%p286) target = $region52
      $region51: #{tpu_custom_call.1} parent=5 // pred_region
        %s289 = ssub.s32 %s12, 2
        // Predicated region
        $region53: #{tpu_custom_call.1} parent=51 // pred_check
          %p290 = pneg %p102
        $region54: #{tpu_custom_call.1} parent=51 // pred_check_branch
          %292 = sbr.rel (%p290) target = $region56
        $region55: #{tpu_custom_call.1} parent=51 // pred_region
          %p293 = scmp.lt.s32.totalorder %s23, 1
          %s294 = scalar_select %p293, %s23, 1
          %s295 = smul.addr %s294, 4
          %s296 = scalar_lea.vmem %s2, %s295
        $region56: #{tpu_custom_call.1} parent=51 // pred_fallthru
          _
      $region52: #{tpu_custom_call.1} parent=5 // pred_fallthru
        _
    $region6: #{tpu_custom_call.1} parent=1 // loop_footer
      %s16 = sadd.s32 1, %s12
    $region7: #{tpu_custom_call.1} parent=1 // loop_footer_branch
      %11 = sbr.rel target = $region3
    $region8: #{tpu_custom_call.1} parent=1 // loop_exit
      _
    %297 = vsyncpa [#allocation4], 1
    %s298 = scalar_lea.sflag [#allocation4], 1
    %299 = vsyncpa %s298, 1
    %300 = vsyncpa [#allocation5], 1
    %s301 = scalar_lea.sflag [#allocation5], 1
    %302 = vsyncpa %s301, 1

</llo_original>
